<compile_context>
chip_gen: v7x
topology: tpu7x:2x2x1
jax: 0.10.0
libtpu: 0.0.40
codegen_flags: <defaults>
</compile_context>

<pallas_src>
import jax
import jax.numpy as jnp
from jax.experimental import pallas as pl
from jax.experimental.pallas import tpu as pltpu


def _vmem_budget_bytes():
    """~3/4 of physical VMEM, capped at 100 MiB; falls back to 48 MiB (safe
    even on v7x's 64 MiB/TC) if the hardware query is unavailable."""
    try:
        cap = int(pltpu.get_tpu_info().vmem_capacity_bytes)
    except Exception:
        cap = 64 * 1024 * 1024
    return min((cap * 3) // 4, 100 * 1024 * 1024)


def _largest_tile(total, target, quantum):
    """Largest divisor of `total` that is a multiple of `quantum` and <= target;
    falls back to `total` (full extent) when no such divisor exists."""
    best = None
    cap = min(total, max(target, quantum))
    d = quantum
    while d <= cap:
        if total % d == 0:
            best = d
        d += quantum
    return best if best is not None else total


def _experts_kernel(se_ref, sj_ref, so_ref, mask_ref, x_ref, guw_ref, dw_ref,
                    out_ref, acc_ref):
    """Grid step = (token tile t, scheduled (expert, intermediate-tile) s)."""
    s = pl.program_id(1)
    n_s = pl.num_programs(1)
    t_i = guw_ref.shape[-1] // 2            # static: fused block is [gate | up]
    step_on = so_ref[s] > 0                 # SMEM flag: real routed step?

    # Zero-fill only if step 0 itself is a skip step (i.e. nothing is routed).
    @pl.when((s == 0) & jnp.logical_not(step_on))
    def _zero():
        acc_ref[...] = jnp.zeros_like(acc_ref)

    @pl.when(step_on)
    def _compute():
        x = x_ref[...]                                              # (tN, H) bf16
        # Fused gate/up projection: one MXU matmul -> (tN, 2*tI) f32.
        gu = jnp.dot(x, guw_ref[0], preferred_element_type=jnp.float32)
        gate, up = gu[:, :t_i], gu[:, t_i:]
        # SiLU gating in f32 (v5e has no bf16 VPU/EUP); mask the activation
        # (tN x tI) instead of x (tN x H) — equivalent since the MLP has no
        # biases and the down projection is linear.
        act = (up * (gate * jax.nn.sigmoid(gate))) * mask_ref[0]
        y = jnp.dot(act.astype(x.dtype), dw_ref[0],
                    preferred_element_type=jnp.float32)

        @pl.when(s == 0)
        def _first():          # first routed step: write, skip zero-fill + add
            acc_ref[...] = y

        @pl.when(s > 0)
        def _rest():
            acc_ref[...] += y

    # Single lane-dense store per token tile, cast from the f32 accumulator.
    @pl.when(s == n_s - 1)
    def _store():
        out_ref[...] = acc_ref[...].astype(out_ref.dtype)


def experts_forward(hidden_states, expert_indices, gate_up_w, down_w, *,
                    token_tile=None, i_tile=None,
                    compute_dtype=jnp.bfloat16,
                    weight_buffers=None,
                    vmem_limit_bytes=None):
    """hidden_states: (N, H); expert_indices: (N, E) 0/1;
    gate_up_w: (E, H, 2I) in (in, out) layout; down_w: (E, I, H).

    weight_buffers: optional pipeline depth for the weight BlockSpecs
    (e.g. 3 on v5e/v6e where 128 MiB VMEM makes a third buffer free)."""
    N, H = hidden_states.shape
    E, H_w, two_I = gate_up_w.shape
    I = two_I // 2
    assert H_w == H and two_I == 2 * I
    assert down_w.shape == (E, I, H)
    assert expert_indices.shape == (N, E)

    # --- per-generation tile / VMEM budget selection -------------------------
    vmem_budget = int(vmem_limit_bytes) if vmem_limit_bytes is not None \
        else _vmem_budget_bytes()
    big_vmem = vmem_budget >= 80 * 1024 * 1024          # v5e / v6e class
    tN = token_tile if token_tile is not None else \
        _largest_tile(N, 512 if big_vmem else 384, 8)
    tI = i_tile if i_tile is not None else \
        _largest_tile(I, 640 if big_vmem else 512, 128)
    assert N % tN == 0, "pad N (tokens) to a multiple of token_tile"
    assert I % tI == 0, "pad I (intermediate) to a multiple of i_tile"
    assert tN == N or tN % 8 == 0, "token_tile must be a multiple of 8"
    n_t, n_j = N // tN, I // tI
    n_steps = E * n_j
    # TODO(synk): v7x decode (n_t == 1): split the j-reduction across the two
    # TensorCores with per-core f32 partial outputs summed by a cheap XLA add.

    # bf16 weights/activations halve weight DMA bytes and hit full MXU rate;
    # matmuls still accumulate in f32 via preferred_element_type.
    x = hidden_states.astype(compute_dtype)
    dn_w = down_w.astype(compute_dtype)

    # Interleave gate_up so each j-block holds [gate_j | up_j] contiguously:
    # one DMA stream + one MXU matmul per step instead of two.
    # TODO(synk): in a real model do this relayout once at weight-load time.
    gu = gate_up_w.astype(compute_dtype)
    gate_w = gu[:, :, :I].reshape(E, H, n_j, tI)
    up_w = gu[:, :, I:].reshape(E, H, n_j, tI)
    gu_int = jnp.concatenate([gate_w, up_w], axis=-1).reshape(E, H, n_j * 2 * tI)

    # Pre-transposed f32 routing mask: one (tN, 1) column block per expert.
    mask = (expert_indices != 0).astype(jnp.float32).T[:, :, None]     # (E, N, 1)

    # --- compacted (expert, j) schedule (scalar-prefetched into SMEM) --------
    # Routed pairs first (stable order); trailing slots repeat the LAST routed
    # pair exactly so the pipeline skips their weight DMA entirely.
    routed = jnp.any(expert_indices != 0, axis=0)                      # (E,)
    pair_routed = jnp.repeat(routed, n_j)                              # (E*n_j,)
    order = jnp.argsort(jnp.logical_not(pair_routed).astype(jnp.int32),
                        stable=True)
    n_routed = jnp.sum(pair_routed.astype(jnp.int32))
    step = jnp.arange(n_steps, dtype=jnp.int32)
    clamped = jnp.minimum(step, jnp.maximum(n_routed - 1, 0))
    sched_pair = jnp.take(order, clamped).astype(jnp.int32)
    sched_e = (sched_pair // n_j).astype(jnp.int32)                    # (S,)
    sched_j = (sched_pair % n_j).astype(jnp.int32)                     # (S,)
    sched_on = (step < n_routed).astype(jnp.int32)                     # (S,)

    def _weight_spec(shape, index_map):
        if weight_buffers is None:
            return pl.BlockSpec(shape, index_map)
        return pl.BlockSpec(shape, index_map,
                            pipeline_mode=pl.Buffered(weight_buffers))

    itemsize = jnp.dtype(compute_dtype).itemsize
    cost = pl.CostEstimate(
        flops=6 * N * I * H * E,
        transcendentals=N * I * E,
        bytes_accessed=(gu_int.size + dn_w.size) * itemsize * n_t
        + x.size * itemsize
        + N * H * jnp.dtype(hidden_states.dtype).itemsize,
    )

    grid_spec = pltpu.PrefetchScalarGridSpec(
        num_scalar_prefetch=3,
        grid=(n_t, n_steps),
        in_specs=[
            # routing mask column of the scheduled expert (tiny; only
            # re-fetched when the scheduled expert changes)
            pl.BlockSpec((1, tN, 1), lambda t, s, se, sj, so: (se[s], t, 0)),
            # token activations: resident across the whole reduction axis
            pl.BlockSpec((tN, H), lambda t, s, se, sj, so: (t, 0)),
            # fused [gate_j | up_j] weight block of the scheduled (expert, j)
            _weight_spec((1, H, 2 * tI),
                         lambda t, s, se, sj, so: (se[s], 0, sj[s])),
            # down_proj rows of the scheduled (expert, j)
            _weight_spec((1, tI, H),
                         lambda t, s, se, sj, so: (se[s], sj[s], 0)),
        ],
        out_specs=pl.BlockSpec((tN, H), lambda t, s, se, sj, so: (t, 0)),
        scratch_shapes=[pltpu.VMEM((tN, H), jnp.float32)],
    )

    # TODO(synk): torch's nonzero/index_select sparse dispatch has no static-
    # shape Pallas equivalent; this dense masked dispatch with a compacted
    # schedule skips both compute and weight DMA for unrouted experts instead.
    return pl.pallas_call(
        _experts_kernel,
        out_shape=jax.ShapeDtypeStruct((N, H), hidden_states.dtype),
        grid_spec=grid_spec,
        compiler_params=pltpu.CompilerParams(
            dimension_semantics=("parallel", "arbitrary"),
            vmem_limit_bytes=int(vmem_budget),
        ),
        cost_estimate=cost,
    )(sched_e, sched_j, sched_on, mask, x, gu_int, dn_w)


def experts_reference(hidden_states, expert_indices, gate_up_w, down_w,
                      compute_dtype=jnp.float32):
    """Pure-JAX reference matching the PyTorch loop semantics."""
    E = gate_up_w.shape[0]
    I = gate_up_w.shape[2] // 2
    x = hidden_states.astype(compute_dtype)
    out = jnp.zeros(hidden_states.shape, jnp.float32)
    for e in range(E):
        up_states = jnp.dot(x, gate_up_w[e].astype(compute_dtype),
                            preferred_element_type=jnp.float32)
        gate, up = up_states[:, :I], up_states[:, I:]
        act = up * (gate * jax.nn.sigmoid(gate))
        y = jnp.dot(act.astype(compute_dtype), down_w[e].astype(compute_dtype),
                    preferred_element_type=jnp.float32)
        gate_on = (expert_indices[:, e] != 0).astype(jnp.float32)[:, None]
        out = out + gate_on * y
    return out.astype(hidden_states.dtype)


if __name__ == "__main__":
    # Small config consistent with the module (tokens, hidden, intermediate,
    # experts); I=256 with i_tile=128 and N=16 with token_tile=8 exercise the
    # intermediate tiling, the token-tile axis, the schedule compaction and
    # the accumulator init/store paths.
    N, H, I, E = 16, 32, 256, 4

    key = jax.random.PRNGKey(0)
    k_x, k_gu, k_dw, k_idx = jax.random.split(key, 4)

    hidden_states = jax.random.normal(k_x, (N, H), dtype=jnp.float32)
    # Phi3MLP has no biases; weights stored directly in (in, out) layout.
    gate_up_w = 0.1 * jax.random.normal(k_gu, (E, H, 2 * I), dtype=jnp.float32)
    down_w = 0.1 * jax.random.normal(k_dw, (E, I, H), dtype=jnp.float32)
    # Binary dispatch mask; expert 2 gets no tokens to exercise the DMA-skip
    # (trailing repeated schedule slots) path.
    expert_indices = (jax.random.uniform(k_idx, (N, E)) < 0.5).astype(jnp.int32)
    expert_indices = expert_indices.at[:, 2].set(0)

    out = experts_forward(hidden_states, expert_indices, gate_up_w, down_w,
                          token_tile=8, i_tile=128,
                          compute_dtype=jnp.bfloat16)
    out = jax.block_until_ready(out)

    # Also exercise the per-generation default tile / VMEM-budget path.
    out_default = experts_forward(hidden_states, expert_indices, gate_up_w,
                                  down_w, compute_dtype=jnp.bfloat16)
    out_default = jax.block_until_ready(out_default)

    # Tight check vs a reference with the same bf16 casts / f32 accumulation.
    ref_bf16 = experts_reference(hidden_states, expert_indices, gate_up_w,
                                 down_w, compute_dtype=jnp.bfloat16)
    assert jnp.allclose(out, ref_bf16, atol=2e-2, rtol=2e-2), \
        "mismatch vs bf16 reference (explicit tiles)"
    assert jnp.allclose(out_default, ref_bf16, atol=2e-2, rtol=2e-2), \
        "mismatch vs bf16 reference (default tiles)"

    # Loose check vs the module-faithful f32 reference (bf16 rounding only).
    ref_f32 = experts_reference(hidden_states, expert_indices, gate_up_w,
                                down_w, compute_dtype=jnp.float32)
    assert jnp.allclose(out, ref_f32, atol=1e-1, rtol=1e-1), \
        "mismatch vs f32 reference"

    print("KERNEL_OK")
</pallas_src>

<mosaic_0001>
module attributes {stable_mosaic.version = 11 : i64} {
  func.func @_experts_kernel(%arg0: i32, %arg1: i32, %arg2: memref<8xi32, #tpu.memory_space<smem>>, %arg3: memref<8xi32, #tpu.memory_space<smem>>, %arg4: memref<8xi32, #tpu.memory_space<smem>>, %arg5: memref<1x8x1xf32, #tpu.memory_space<vmem>>, %arg6: memref<8x32xbf16, #tpu.memory_space<vmem>>, %arg7: memref<1x32x256xbf16, #tpu.memory_space<vmem>>, %arg8: memref<1x128x32xbf16, #tpu.memory_space<vmem>>, %arg9: memref<8x32xf32, #tpu.memory_space<vmem>>, %arg10: memref<8x32xf32, #tpu.memory_space<vmem>>) attributes {dimension_semantics = [#tpu.dimension_semantics<parallel>, #tpu.dimension_semantics<arbitrary>], iteration_bounds = array<i64: 2, 8>, scalar_prefetch = 3 : i64, scratch_operands = 1 : i64, tpu.core_type = #tpu.core_type<tc>, window_params = [{transform_indices = @transform_0, window_bounds = array<i64: 1, 8, 1>}, {transform_indices = @transform_1, window_bounds = array<i64: 8, 32>}, {transform_indices = @transform_2, window_bounds = array<i64: 1, 32, 256>}, {transform_indices = @transform_3, window_bounds = array<i64: 1, 128, 32>}, {transform_indices = @transform_4, window_bounds = array<i64: 8, 32>}]} {
    %0 = arith.index_cast %arg1 : i32 to index
    %1 = memref.load %arg4[%0] : memref<8xi32, #tpu.memory_space<smem>>
    %c0_i32 = arith.constant 0 : i32
    %2 = arith.cmpi sgt, %1, %c0_i32 : i32
    %c0_i32_0 = arith.constant 0 : i32
    %3 = arith.cmpi eq, %arg1, %c0_i32_0 : i32
    %true = arith.constant true
    %4 = arith.xori %2, %true : i1
    %5 = arith.andi %3, %4 : i1
    %6 = arith.extui %5 : i1 to i32
    %c0_i32_1 = arith.constant 0 : i32
    %7 = arith.cmpi ne, %6, %c0_i32_1 : i32
    scf.if %7 {
      %cst = arith.constant 0.000000e+00 : f32
      %13 = vector.broadcast %cst : f32 to vector<8x32xf32>
      %c0 = arith.constant 0 : index
      %c0_4 = arith.constant 0 : index
      %14 = vector.load %arg10[%c0, %c0_4] : memref<8x32xf32, #tpu.memory_space<vmem>>, vector<8x32xf32>
      tpu.vector_store %arg10[%c0, %c0_4], %13 {strides = array<i32>} : memref<8x32xf32, #tpu.memory_space<vmem>>, vector<8x32xf32>,
    } else {
    }
    %8 = arith.extui %2 : i1 to i32
    %c0_i32_2 = arith.constant 0 : i32
    %9 = arith.cmpi ne, %8, %c0_i32_2 : i32
    scf.if %9 {
      %c0 = arith.constant 0 : index
      %c0_4 = arith.constant 0 : index
      %13 = vector.load %arg6[%c0, %c0_4] : memref<8x32xbf16, #tpu.memory_space<vmem>>, vector<8x32xbf16>
      %c0_5 = arith.constant 0 : index
      %c0_6 = arith.constant 0 : index
      %c0_7 = arith.constant 0 : index
      %14 = vector.load %arg7[%c0_5, %c0_6, %c0_7] : memref<1x32x256xbf16, #tpu.memory_space<vmem>>, vector<1x32x256xbf16>
      %15 = vector.shape_cast %14 : vector<1x32x256xbf16> to vector<32x256xbf16>
      %cst = arith.constant dense<0.000000e+00> : vector<8x256xf32>
      %16 = tpu.matmul %13, %15, %cst {dimension_numbers = #tpu.dot_dimension_numbers<[1], [0], [0], [1], [0, 0, 1, 1], [], []>} : vector<8x32xbf16>, vector<32x256xbf16>, vector<8x256xf32> -> vector<8x256xf32>
      %17 = vector.extract_strided_slice %16 {offsets = [0, 0], sizes = [8, 128], strides = [1, 1]} : vector<8x256xf32> to vector<8x128xf32>
      %18 = vector.extract_strided_slice %16 {offsets = [0, 128], sizes = [8, 128], strides = [1, 1]} : vector<8x256xf32> to vector<8x128xf32>
      %19 = arith.negf %17 : vector<8x128xf32>
      %20 = math.exp %19 : vector<8x128xf32>
      %cst_8 = arith.constant 1.000000e+00 : f32
      %21 = vector.broadcast %cst_8 : f32 to vector<8x128xf32>
      %22 = arith.addf %21, %20 : vector<8x128xf32>
      %23 = arith.divf %21, %22 : vector<8x128xf32>
      %24 = arith.mulf %17, %23 : vector<8x128xf32>
      %25 = arith.mulf %18, %24 : vector<8x128xf32>
      %c0_9 = arith.constant 0 : index
      %c0_10 = arith.constant 0 : index
      %c0_11 = arith.constant 0 : index
      %26 = vector.load %arg5[%c0_9, %c0_10, %c0_11] : memref<1x8x1xf32, #tpu.memory_space<vmem>>, vector<1x8x1xf32>
      %27 = vector.shape_cast %26 : vector<1x8x1xf32> to vector<8x1xf32>
      %28 = vector.broadcast %27 : vector<8x1xf32> to vector<8x128xf32>
      %29 = arith.mulf %25, %28 : vector<8x128xf32>
      %30 = arith.truncf %29 : vector<8x128xf32> to vector<8x128xbf16>
      %c0_12 = arith.constant 0 : index
      %c0_13 = arith.constant 0 : index
      %c0_14 = arith.constant 0 : index
      %31 = vector.load %arg8[%c0_12, %c0_13, %c0_14] : memref<1x128x32xbf16, #tpu.memory_space<vmem>>, vector<1x128x32xbf16>
      %32 = vector.shape_cast %31 : vector<1x128x32xbf16> to vector<128x32xbf16>
      %cst_15 = arith.constant dense<0.000000e+00> : vector<8x32xf32>
      %33 = tpu.matmul %30, %32, %cst_15 {dimension_numbers = #tpu.dot_dimension_numbers<[1], [0], [0], [1], [0, 0, 1, 1], [], []>} : vector<8x128xbf16>, vector<128x32xbf16>, vector<8x32xf32> -> vector<8x32xf32>
      %c0_i32_16 = arith.constant 0 : i32
      %34 = arith.cmpi eq, %arg1, %c0_i32_16 : i32
      %35 = arith.extui %34 : i1 to i32
      %c0_i32_17 = arith.constant 0 : i32
      %36 = arith.cmpi ne, %35, %c0_i32_17 : i32
      scf.if %36 {
        %c0_20 = arith.constant 0 : index
        %c0_21 = arith.constant 0 : index
        %40 = vector.load %arg10[%c0_20, %c0_21] : memref<8x32xf32, #tpu.memory_space<vmem>>, vector<8x32xf32>
        tpu.vector_store %arg10[%c0_20, %c0_21], %33 {strides = array<i32>} : memref<8x32xf32, #tpu.memory_space<vmem>>, vector<8x32xf32>,
      } else {
      }
      %c0_i32_18 = arith.constant 0 : i32
      %37 = arith.cmpi sgt, %arg1, %c0_i32_18 : i32
      %38 = arith.extui %37 : i1 to i32
      %c0_i32_19 = arith.constant 0 : i32
      %39 = arith.cmpi ne, %38, %c0_i32_19 : i32
      scf.if %39 {
        %c0_20 = arith.constant 0 : index
        %c0_21 = arith.constant 0 : index
        %40 = vector.load %arg10[%c0_20, %c0_21] : memref<8x32xf32, #tpu.memory_space<vmem>>, vector<8x32xf32>
        %41 = arith.addf %40, %33 : vector<8x32xf32>
        %c0_22 = arith.constant 0 : index
        %c0_23 = arith.constant 0 : index
        %42 = vector.load %arg10[%c0_22, %c0_23] : memref<8x32xf32, #tpu.memory_space<vmem>>, vector<8x32xf32>
        tpu.vector_store %arg10[%c0_22, %c0_23], %41 {strides = array<i32>} : memref<8x32xf32, #tpu.memory_space<vmem>>, vector<8x32xf32>,
      } else {
      }
    } else {
    }
    %c7_i32 = arith.constant 7 : i32
    %10 = arith.cmpi eq, %arg1, %c7_i32 : i32
    %11 = arith.extui %10 : i1 to i32
    %c0_i32_3 = arith.constant 0 : i32
    %12 = arith.cmpi ne, %11, %c0_i32_3 : i32
    scf.if %12 {
      %c0 = arith.constant 0 : index
      %c0_4 = arith.constant 0 : index
      %13 = vector.load %arg10[%c0, %c0_4] : memref<8x32xf32, #tpu.memory_space<vmem>>, vector<8x32xf32>
      %c0_5 = arith.constant 0 : index
      %c0_6 = arith.constant 0 : index
      %14 = vector.load %arg9[%c0_5, %c0_6] : memref<8x32xf32, #tpu.memory_space<vmem>>, vector<8x32xf32>
      tpu.vector_store %arg9[%c0_5, %c0_6], %13 {strides = array<i32>} : memref<8x32xf32, #tpu.memory_space<vmem>>, vector<8x32xf32>,
    } else {
    }
    return
  }
  func.func @transform_0(%arg0: i32, %arg1: i32, %arg2: memref<8xi32, #tpu.memory_space<smem>>, %arg3: memref<8xi32, #tpu.memory_space<smem>>, %arg4: memref<8xi32, #tpu.memory_space<smem>>) -> (i32, i32, i32) {
    %0 = arith.index_cast %arg1 : i32 to index
    %1 = memref.load %arg2[%0] : memref<8xi32, #tpu.memory_space<smem>>
    %c0_i32 = arith.constant 0 : i32
    %c0_i32_0 = arith.constant 0 : i32
    return %1, %arg0, %c0_i32 : i32, i32, i32
  }
  func.func @transform_1(%arg0: i32, %arg1: i32, %arg2: memref<8xi32, #tpu.memory_space<smem>>, %arg3: memref<8xi32, #tpu.memory_space<smem>>, %arg4: memref<8xi32, #tpu.memory_space<smem>>) -> (i32, i32) {
    %c0_i32 = arith.constant 0 : i32
    %c0_i32_0 = arith.constant 0 : i32
    return %arg0, %c0_i32 : i32, i32
  }
  func.func @transform_2(%arg0: i32, %arg1: i32, %arg2: memref<8xi32, #tpu.memory_space<smem>>, %arg3: memref<8xi32, #tpu.memory_space<smem>>, %arg4: memref<8xi32, #tpu.memory_space<smem>>) -> (i32, i32, i32) {
    %0 = arith.index_cast %arg1 : i32 to index
    %1 = memref.load %arg2[%0] : memref<8xi32, #tpu.memory_space<smem>>
    %2 = arith.index_cast %arg1 : i32 to index
    %3 = memref.load %arg3[%2] : memref<8xi32, #tpu.memory_space<smem>>
    %c0_i32 = arith.constant 0 : i32
    %c0_i32_0 = arith.constant 0 : i32
    return %1, %c0_i32, %3 : i32, i32, i32
  }
  func.func @transform_3(%arg0: i32, %arg1: i32, %arg2: memref<8xi32, #tpu.memory_space<smem>>, %arg3: memref<8xi32, #tpu.memory_space<smem>>, %arg4: memref<8xi32, #tpu.memory_space<smem>>) -> (i32, i32, i32) {
    %0 = arith.index_cast %arg1 : i32 to index
    %1 = memref.load %arg2[%0] : memref<8xi32, #tpu.memory_space<smem>>
    %2 = arith.index_cast %arg1 : i32 to index
    %3 = memref.load %arg3[%2] : memref<8xi32, #tpu.memory_space<smem>>
    %c0_i32 = arith.constant 0 : i32
    %c0_i32_0 = arith.constant 0 : i32
    return %1, %3, %c0_i32 : i32, i32, i32
  }
  func.func @transform_4(%arg0: i32, %arg1: i32, %arg2: memref<8xi32, #tpu.memory_space<smem>>, %arg3: memref<8xi32, #tpu.memory_space<smem>>, %arg4: memref<8xi32, #tpu.memory_space<smem>>) -> (i32, i32) {
    %c0_i32 = arith.constant 0 : i32
    %c0_i32_0 = arith.constant 0 : i32
    return %arg0, %c0_i32 : i32, i32
  }
}

</mosaic_0001>

<llo_original>
// kernel: tpu_custom_call.1
$region0: #{tpu_custom_call.1}
  #allocation0 [shape = 'u32[]', space=smem, size = 0x4, offset = 0x4, fixed_abs, tag = 'smem constant byte address 0x4 - core index']
  #allocation1 [shape = 'u32[144,128]{1,0:T(1,128)}', space=vmem, size = 0x12000, scoped, tag = 'internal scratch']
  #allocation2 [shape = 'f32[8,32]{1,0:T(8,128)}', space=vmem, size = 0x1000, scoped, tag = 'scratch operand']
  #allocation3 [shape = 's32[1]{0}', space=sflag, size = 0x4, scoped, tag = 'scoped memory for tpu_custom_call.1']
  #allocation4 [shape = 'u8[512]{0}', space=smem, size = 0x200, scoped, tag = 'prefetched SMEM operand 0']
  #allocation5 [shape = 'u8[512]{0}', space=smem, size = 0x200, scoped, tag = 'prefetched SMEM operand 1']
  #allocation6 [shape = 'u8[512]{0}', space=smem, size = 0x200, scoped, tag = 'prefetched SMEM operand 2']
  %s0 = inlined_call_operand.vmem [shape: s32[8], index: 0, kind: input, shape index: {}]
  %s1 = inlined_call_operand.vmem [shape: s32[8], index: 1, kind: input, shape index: {}]
  %s2 = inlined_call_operand.vmem [shape: s32[8], index: 2, kind: input, shape index: {}]
  %s3 = inlined_call_operand.vmem [shape: f32[4,16,1], index: 3, kind: input, shape index: {}]
  %s4 = inlined_call_operand.vmem [shape: bf16[16,32], index: 4, kind: input, shape index: {}]
  %s5 = inlined_call_operand.vmem [shape: bf16[4,32,512], index: 5, kind: input, shape index: {}]
  %s6 = inlined_call_operand.vmem [shape: bf16[4,256,32], index: 6, kind: input, shape index: {}]
  %s7 = inlined_call_operand.hbm [shape: f32[16,32], index: 7, kind: output, shape index: {}]
  %s8 = sld [smem:[#allocation0]]
  $region107: #{tpu_custom_call.1} parent=0
    _
  %s10 = ssub.s32 1, %s8
  %s11 = scalar_select 0, %s10, %s8
  %s12 = sshll.u32 %s0, 4
  %s13 = int_to_ptr.vmem [resolvable:$true] %s12
  %15 = dma.vmem_to_smem %s13, 16, [#allocation4], [#allocation3]
  %s16 = sshll.u32 %s1, 4
  %s17 = int_to_ptr.vmem [resolvable:$true] %s16
  %19 = dma.vmem_to_smem %s17, 16, [#allocation5], [#allocation3]
  %s20 = sshll.u32 %s2, 4
  %s21 = int_to_ptr.vmem [resolvable:$true] %s20
  %23 = dma.vmem_to_smem %s21, 16, [#allocation6], [#allocation3]
  %24 = dma.done [#allocation3], 48
  %25 = sfence
  $region1: #{tpu_custom_call.1} parent=0
    #allocation7 [shape = 'u8[32768]{0}', space=vmem, size = 0x8000, scoped, tag = 'input window, operand 5']
    #allocation8 [shape = 'u8[8192]{0}', space=vmem, size = 0x2000, scoped, tag = 'output window, operand 0']
    #allocation9 [shape = 's32[2]{0}', space=sflag, size = 0x8, scoped, tag = 'scoped memory for tpu_custom_call.1']
    %26 = vsyncpa [#allocation9], 0
    %s27 = scalar_lea.sflag [#allocation9], 1
    %28 = vsyncpa %s27, 0
    loop: start=0, step=1, limit=18
    $region2: #{tpu_custom_call.1} parent=1 // loop_pre_header
      _
    $region3: #{tpu_custom_call.1} parent=1 // loop_header
      %s30 = sphi 0, %s34
      %p31 = scmp.ge.s32.totalorder %s30, 18
      %s37 = sphi 0, %s49
      %s38 = sphi 0, %s45
      %s39 = sphi 0, %s37
      %s40 = sphi 0, %s38
      %s41 = sphi 0, %s39
      %s42 = sphi 0, %s40
      %s56 = sphi 0, %s58
      %s59 = sphi 0, %s56
      %s60 = sphi 0, %s59
      %s76 = sphi 0, %s60
      %s82 = sphi 0, %s84
      %s85 = sphi 0, %s82
      %s86 = sphi 0, %s85
      %s102 = sphi 0, %s86
      %s114 = sphi 0, %s116
      %s117 = sphi 0, %s114
      %s118 = sphi 0, %s117
      %s134 = sphi 0, %s118
      %s146 = sphi 0, %s148
      %s149 = sphi 0, %s146
      %s150 = sphi 0, %s149
      %s166 = sphi 0, %s150
      %s172 = sphi 0, %s174
      %s175 = sphi 0, %s172
      %s176 = sphi 0, %s175
      %s192 = sphi 0, %s176
    $region4: #{tpu_custom_call.1} parent=1 // loop_header_branch
      %33 = sbr.rel (%p31) target = $region8
    $region5: #{tpu_custom_call.1} parent=1 // loop_body
      %s35 = ssub.s32 %s30, 1
      %s36 = ssub.s32 %s30, 2
      %s43 = sadd.s32 1, %s38
      %p44 = scmp.ge.s32.totalorder %s43, 8
      %s45 = scalar_select %p44, 0, %s43
      %s46 = sadd.s32 1, %s37
      %s47 = scalar_select %p44, %s46, %s37
      %p48 = scmp.ge.s32.totalorder %s47, 2
      %s49 = scalar_select %p48, 0, %s47
      %s50 = sld [smem:[#allocation4 + %s38]]
      %s51 = sld [smem:[#allocation4 + %s45]]
      %s52 = ssub.s32 %s50, %s51
      %s53 = ssub.s32 %s37, %s49
      %s54 = sor.u32 %s52, %s53
      %p55 = scmp.eq.s32.totalorder %s54, 0
      %s57 = sadd.s32 %s56, 1
      %s58 = scalar_select %p55, %s56, %s57
      %p61 = pneg %p55
      %p62 = scmp.eq.s32.totalorder %s30, 15
      %p63 = por %p61, %p62
      %p64 = scmp.ne.s32.totalorder %s56, %s59
      %p65 = scmp.eq.s32.totalorder %s30, 0
      %p66 = por %p64, %p65
      %p67 = scmp.ne.s32.totalorder %s56, %s59
      %p68 = scmp.eq.s32.totalorder %s35, 15
      %p69 = por %p67, %p68
      %p70 = scmp.ne.s32.totalorder %s59, %s60
      %p71 = scmp.eq.s32.totalorder %s35, 0
      %p72 = por %p70, %p71
      %p73 = scmp.ne.s32.totalorder %s59, %s60
      %p74 = scmp.eq.s32.totalorder %s36, 15
      %p75 = por %p73, %p74
      %p77 = scmp.ne.s32.totalorder %s60, %s76
      %p78 = scmp.eq.s32.totalorder %s36, 0
      %p79 = por %p77, %p78
      %s80 = ssub.s32 %s37, %s49
      %p81 = scmp.eq.s32.totalorder %s80, 0
      %s83 = sadd.s32 %s82, 1
      %s84 = scalar_select %p81, %s82, %s83
      %p87 = pneg %p81
      %p88 = scmp.eq.s32.totalorder %s30, 15
      %p89 = por %p87, %p88
      %p90 = scmp.ne.s32.totalorder %s82, %s85
      %p91 = scmp.eq.s32.totalorder %s30, 0
      %p92 = por %p90, %p91
      %p93 = scmp.ne.s32.totalorder %s82, %s85
      %p94 = scmp.eq.s32.totalorder %s35, 15
      %p95 = por %p93, %p94
      %p96 = scmp.ne.s32.totalorder %s85, %s86
      %p97 = scmp.eq.s32.totalorder %s35, 0
      %p98 = por %p96, %p97
      %p99 = scmp.ne.s32.totalorder %s85, %s86
      %p100 = scmp.eq.s32.totalorder %s36, 15
      %p101 = por %p99, %p100
      %p103 = scmp.ne.s32.totalorder %s86, %s102
      %p104 = scmp.eq.s32.totalorder %s36, 0
      %p105 = por %p103, %p104
      %s106 = sld [smem:[#allocation4 + %s38]]
      %s107 = sld [smem:[#allocation5 + %s38]]
      %s108 = sld [smem:[#allocation4 + %s45]]
      %s109 = sld [smem:[#allocation5 + %s45]]
      %s110 = ssub.s32 %s106, %s108
      %s111 = ssub.s32 %s107, %s109
      %s112 = sor.u32 %s110, %s111
      %p113 = scmp.eq.s32.totalorder %s112, 0
      %s115 = sadd.s32 %s114, 1
      %s116 = scalar_select %p113, %s114, %s115
      %p119 = pneg %p113
      %p120 = scmp.eq.s32.totalorder %s30, 15
      %p121 = por %p119, %p120
      %p122 = scmp.ne.s32.totalorder %s114, %s117
      %p123 = scmp.eq.s32.totalorder %s30, 0
      %p124 = por %p122, %p123
      %p125 = scmp.ne.s32.totalorder %s114, %s117
      %p126 = scmp.eq.s32.totalorder %s35, 15
      %p127 = por %p125, %p126
      %p128 = scmp.ne.s32.totalorder %s117, %s118
      %p129 = scmp.eq.s32.totalorder %s35, 0
      %p130 = por %p128, %p129
      %p131 = scmp.ne.s32.totalorder %s117, %s118
      %p132 = scmp.eq.s32.totalorder %s36, 15
      %p133 = por %p131, %p132
      %p135 = scmp.ne.s32.totalorder %s118, %s134
      %p136 = scmp.eq.s32.totalorder %s36, 0
      %p137 = por %p135, %p136
      %s138 = sld [smem:[#allocation4 + %s38]]
      %s139 = sld [smem:[#allocation5 + %s38]]
      %s140 = sld [smem:[#allocation4 + %s45]]
      %s141 = sld [smem:[#allocation5 + %s45]]
      %s142 = ssub.s32 %s138, %s140
      %s143 = ssub.s32 %s139, %s141
      %s144 = sor.u32 %s142, %s143
      %p145 = scmp.eq.s32.totalorder %s144, 0
      %s147 = sadd.s32 %s146, 1
      %s148 = scalar_select %p145, %s146, %s147
      %p151 = pneg %p145
      %p152 = scmp.eq.s32.totalorder %s30, 15
      %p153 = por %p151, %p152
      %p154 = scmp.ne.s32.totalorder %s146, %s149
      %p155 = scmp.eq.s32.totalorder %s30, 0
      %p156 = por %p154, %p155
      %p157 = scmp.ne.s32.totalorder %s146, %s149
      %p158 = scmp.eq.s32.totalorder %s35, 15
      %p159 = por %p157, %p158
      %p160 = scmp.ne.s32.totalorder %s149, %s150
      %p161 = scmp.eq.s32.totalorder %s35, 0
      %p162 = por %p160, %p161
      %p163 = scmp.ne.s32.totalorder %s149, %s150
      %p164 = scmp.eq.s32.totalorder %s36, 15
      %p165 = por %p163, %p164
      %p167 = scmp.ne.s32.totalorder %s150, %s166
      %p168 = scmp.eq.s32.totalorder %s36, 0
      %p169 = por %p167, %p168
      %s170 = ssub.s32 %s37, %s49
      %p171 = scmp.eq.s32.totalorder %s170, 0
      %s173 = sadd.s32 %s172, 1
      %s174 = scalar_select %p171, %s172, %s173
      %p177 = pneg %p171
      %p178 = scmp.eq.s32.totalorder %s30, 15
      %p179 = por %p177, %p178
      %p180 = scmp.ne.s32.totalorder %s172, %s175
      %p181 = scmp.eq.s32.totalorder %s30, 0
      %p182 = por %p180, %p181
      %p183 = scmp.ne.s32.totalorder %s172, %s175
      %p184 = scmp.eq.s32.totalorder %s35, 15
      %p185 = por %p183, %p184
      %p186 = scmp.ne.s32.totalorder %s175, %s176
      %p187 = scmp.eq.s32.totalorder %s35, 0
      %p188 = por %p186, %p187
      %p189 = scmp.ne.s32.totalorder %s175, %s176
      %p190 = scmp.eq.s32.totalorder %s36, 15
      %p191 = por %p189, %p190
      %p193 = scmp.ne.s32.totalorder %s176, %s192
      %p194 = scmp.eq.s32.totalorder %s36, 0
      %p195 = por %p193, %p194
      %p196 = scmp.le.s32.totalorder 1, %s30
      %p197 = scmp.lt.s32.totalorder %s30, 17
      %p198 = pnand %p196, %p197
      %p199 = pneg %p198
      // Predicated region
      $region9: #{tpu_custom_call.1} parent=5 // pred_check
        _
      $region10: #{tpu_custom_call.1} parent=5 // pred_check_branch
        %201 = sbr.rel (%p198) target = $region12
      $region11: #{tpu_custom_call.1} parent=5 // pred_region
        %s202 = ssub.s32 %s30, 1
      $region12: #{tpu_custom_call.1} parent=5 // pred_fallthru
        _
      %p203 = scmp.lt.s32.totalorder %s30, 16
      // Predicated region
      $region13: #{tpu_custom_call.1} parent=5 // pred_check
        %p204 = pneg %p203
      $region14: #{tpu_custom_call.1} parent=5 // pred_check_branch
        %206 = sbr.rel (%p204) target = $region16
      $region15: #{tpu_custom_call.1} parent=5 // pred_region
        // Predicated region
        $region17: #{tpu_custom_call.1} parent=15 // pred_check
          %p207 = pneg %p66
        $region18: #{tpu_custom_call.1} parent=15 // pred_check_branch
          %209 = sbr.rel (%p207) target = $region20
        $region19: #{tpu_custom_call.1} parent=15 // pred_region
          %s210 = sld [smem:[#allocation4 + %s38]]
          %p211 = scmp.lt.s32.totalorder %s210, 3
          %s212 = scalar_select %p211, %s210, 3
          %p213 = scmp.lt.s32.totalorder %s37, 1
          %s214 = scalar_select %p213, %s37, 1
          %s215 = smul.addr %s212, 2
          %s216 = sadd.s32 %s214, %s215
          %s217 = smul.addr %s216, 8
          %s218 = scalar_lea.vmem %s3, %s217
          %s219 = sld [smem:[#allocation4 + %s38]]
        $region20: #{tpu_custom_call.1} parent=15 // pred_fallthru
          _
        // Predicated region
        $region21: #{tpu_custom_call.1} parent=15 // pred_check
          %p220 = pneg %p92
        $region22: #{tpu_custom_call.1} parent=15 // pred_check_branch
          %222 = sbr.rel (%p220) target = $region24
        $region23: #{tpu_custom_call.1} parent=15 // pred_region
          %p223 = scmp.lt.s32.totalorder %s37, 1
          %s224 = scalar_select %p223, %s37, 1
          %s225 = smul.addr %s224, 4
          %s226 = scalar_lea.vmem %s4, %s225
        $region24: #{tpu_custom_call.1} parent=15 // pred_fallthru
          _
        // Predicated region
        $region25: #{tpu_custom_call.1} parent=15 // pred_check
          %p227 = pneg %p124
        $region26: #{tpu_custom_call.1} parent=15 // pred_check_branch
          %229 = sbr.rel (%p227) target = $region28
        $region27: #{tpu_custom_call.1} parent=15 // pred_region
          %s230 = sand.u32 %s114, 1
          %s231 = sand.u32 %s114, 1
          %s232 = smul.addr %s231, 32
          %s233 = scalar_lea.vmem [#allocation7], %s232
          %s234 = sld [smem:[#allocation4 + %s38]]
          %s235 = sld [smem:[#allocation5 + %s38]]
          %s236 = smul.u32 2, %s235
          %s237 = smul.addr %s234, 16
          %s238 = sadd.s32 %s236, %s237
          %s239 = smul.addr %s238, 4
          %s240 = scalar_lea.vmem %s5, %s239
          // Predicated region
          $region29: #{tpu_custom_call.1} parent=27 // pred_check
            _
          $region30: #{tpu_custom_call.1} parent=27 // pred_check_branch
            %242 = sbr.rel (0) target = $region32
          $region31: #{tpu_custom_call.1} parent=27 // pred_region
            // Predicated region
            $region33: #{tpu_custom_call.1} parent=31 // pred_check
              _
            $region34: #{tpu_custom_call.1} parent=31 // pred_check_branch
              %244 = sbr.rel (0) target = $region36
            $region35: #{tpu_custom_call.1} parent=31 // pred_region
              // Predicated region
              $region48: #{tpu_custom_call.1} parent=35 // pred_check
                _
              $region49: #{tpu_custom_call.1} parent=35 // pred_check_branch
                %265 = sbr.rel (0) target = $region51
              $region50: #{tpu_custom_call.1} parent=35 // pred_region
                loop: start=0, step=1, limit=1
                $region52: #{tpu_custom_call.1} parent=50 // loop_pre_header
                  _
                $region53: #{tpu_custom_call.1} parent=50 // loop_header
                  %s267 = sphi 0, %s271
                  %p268 = scmp.ge.s32.totalorder %s267, 1
                  %s272 = sphi %s240, %s240
                  %s273 = sphi %s233, %s233
                $region54: #{tpu_custom_call.1} parent=50 // loop_header_branch
                  %270 = sbr.rel (%p268) target = $region58
                $region55: #{tpu_custom_call.1} parent=50 // loop_body
                  %v274 = vld [vmem:[%s272] sm:$0xff]
                  %275 = vst [vmem:[%s273] sm:$0xff] %v274
                  %v276 = vld [vmem:[%s272 + $0x10] sm:$0xff]
                  %277 = vst [vmem:[%s273 + $0x8] sm:$0xff] %v276
                  %v278 = vld [vmem:[%s272 + $0x20] sm:$0xff]
                  %279 = vst [vmem:[%s273 + $0x10] sm:$0xff] %v278
                  %v280 = vld [vmem:[%s272 + $0x30] sm:$0xff]
                  %281 = vst [vmem:[%s273 + $0x18] sm:$0xff] %v280
                $region56: #{tpu_custom_call.1} parent=50 // loop_footer
                  %s271 = sadd.s32 1, %s267
                $region57: #{tpu_custom_call.1} parent=50 // loop_footer_branch
                  %266 = sbr.rel target = $region53
                $region58: #{tpu_custom_call.1} parent=50 // loop_exit
                  _
              $region51: #{tpu_custom_call.1} parent=35 // pred_fallthru
                _
              // Predicated region
              $region59: #{tpu_custom_call.1} parent=35 // pred_check
                _
              $region60: #{tpu_custom_call.1} parent=35 // pred_check_branch
                %283 = sbr.rel target = $region62
              $region61: #{tpu_custom_call.1} parent=35 // pred_region
                _
              $region62: #{tpu_custom_call.1} parent=35 // pred_fallthru
                _
            $region36: #{tpu_custom_call.1} parent=31 // pred_fallthru
              _
            // Predicated region
            $region37: #{tpu_custom_call.1} parent=31 // pred_check
              _
            $region38: #{tpu_custom_call.1} parent=31 // pred_check_branch
              %246 = sbr.rel target = $region40
            $region39: #{tpu_custom_call.1} parent=31 // pred_region
              loop: start=0, step=1, limit=1
              $region41: #{tpu_custom_call.1} parent=39 // loop_pre_header
                _
              $region42: #{tpu_custom_call.1} parent=39 // loop_header
                %s249 = sphi 0, %s253
                %p250 = scmp.ge.s32.totalorder %s249, 1
                %s254 = sphi %s240, %s240
                %s255 = sphi %s233, %s233
              $region43: #{tpu_custom_call.1} parent=39 // loop_header_branch
                %252 = sbr.rel (%p250) target = $region47
              $region44: #{tpu_custom_call.1} parent=39 // loop_body
                %v256 = vld [vmem:[%s254] sm:$0xff]
                %257 = vst [vmem:[%s255] sm:$0xff] %v256
                %v258 = vld [vmem:[%s254 + $0x10] sm:$0xff]
                %259 = vst [vmem:[%s255 + $0x8] sm:$0xff] %v258
                %v260 = vld [vmem:[%s254 + $0x20] sm:$0xff]
                %261 = vst [vmem:[%s255 + $0x10] sm:$0xff] %v260
                %v262 = vld [vmem:[%s254 + $0x30] sm:$0xff]
                %263 = vst [vmem:[%s255 + $0x18] sm:$0xff] %v262
              $region45: #{tpu_custom_call.1} parent=39 // loop_footer
                %s253 = sadd.s32 1, %s249
              $region46: #{tpu_custom_call.1} parent=39 // loop_footer_branch
                %248 = sbr.rel target = $region42
              $region47: #{tpu_custom_call.1} parent=39 // loop_exit
                _
            $region40: #{tpu_custom_call.1} parent=31 // pred_fallthru
              _
          $region32: #{tpu_custom_call.1} parent=27 // pred_fallthru
            _
          %284 = vnop
        $region28: #{tpu_custom_call.1} parent=15 // pred_fallthru
          _
        // Predicated region
        $region63: #{tpu_custom_call.1} parent=15 // pred_check
          %p285 = pneg %p156
        $region64: #{tpu_custom_call.1} parent=15 // pred_check_branch
          %287 = sbr.rel (%p285) target = $region66
        $region65: #{tpu_custom_call.1} parent=15 // pred_region
          %s288 = sld [smem:[#allocation4 + %s38]]
          %s289 = sld [smem:[#allocation5 + %s38]]
          %s290 = smul.u32 16, %s289
          %p291 = scmp.lt.s32.totalorder %s288, 3
          %s292 = scalar_select %p291, %s288, 3
          %p293 = scmp.lt.s32.totalorder %s290, 31
          %s294 = scalar_select %p293, %s290, 31
          %s295 = smul.addr %s292, 32
          %s296 = sadd.s32 %s294, %s295
          %s297 = smul.addr %s296, 4
          %s298 = scalar_lea.vmem %s6, %s297
          %s299 = sld [smem:[#allocation4 + %s38]]
          %s300 = sld [smem:[#allocation5 + %s38]]
          %s301 = smul.u32 16, %s300
        $region66: #{tpu_custom_call.1} parent=15 // pred_fallthru
          _
      $region16: #{tpu_custom_call.1} parent=5 // pred_fallthru
        _
      %p302 = scmp.le.s32.totalorder 1, %s30
      %p303 = scmp.lt.s32.totalorder %s30, 17
      %p304 = pnand %p302, %p303
      %p305 = pneg %p304
      // Predicated region
      $region67: #{tpu_custom_call.1} parent=5 // pred_check
        _
      $region68: #{tpu_custom_call.1} parent=5 // pred_check_branch
        %307 = sbr.rel (%p304) target = $region70
      $region69: #{tpu_custom_call.1} parent=5 // pred_region
        %s308 = ssub.s32 %s30, 1
        %s309 = sand.u32 %s117, 1
        %s310 = sand.u32 %s117, 1
        %s311 = smul.addr %s310, 32
        %s312 = scalar_lea.vmem [#allocation7], %s311
        // Predicated region
        $region71: #{tpu_custom_call.1} parent=69 // pred_check
          %p313 = pneg %p130
        $region72: #{tpu_custom_call.1} parent=69 // pred_check_branch
          %315 = sbr.rel (%p313) target = $region74
        $region73: #{tpu_custom_call.1} parent=69 // pred_region
          _
        $region74: #{tpu_custom_call.1} parent=69 // pred_fallthru
          _
        %s316 = sld [smem:[#allocation4 + %s40]]
        %p317 = scmp.lt.s32.totalorder %s316, 3
        %s318 = scalar_select %p317, %s316, 3
        %p319 = scmp.lt.s32.totalorder %s39, 1
        %s320 = scalar_select %p319, %s39, 1
        %s321 = smul.addr %s318, 2
        %s322 = sadd.s32 %s320, %s321
        %s323 = smul.addr %s322, 8
        %s324 = scalar_lea.vmem %s3, %s323
        %p325 = pneg %p72
        %p326 = pneg %p69
        %p327 = scmp.lt.s32.totalorder %s39, 1
        %s328 = scalar_select %p327, %s39, 1
        %s329 = smul.addr %s328, 4
        %s330 = scalar_lea.vmem %s4, %s329
        %p331 = pneg %p98
        %p332 = pneg %p95
        %s333 = sand.u32 %s117, 1
        %s334 = sand.u32 %s117, 1
        %s335 = smul.addr %s334, 32
        %s336 = scalar_lea.vmem [#allocation7], %s335
        %p337 = pneg %p130
        %p338 = pneg %p127
        %s339 = sld [smem:[#allocation4 + %s40]]
        %s340 = sld [smem:[#allocation5 + %s40]]
        %s341 = smul.u32 16, %s340
        %p342 = scmp.lt.s32.totalorder %s339, 3
        %s343 = scalar_select %p342, %s339, 3
        %p344 = scmp.lt.s32.totalorder %s341, 31
        %s345 = scalar_select %p344, %s341, 31
        %s346 = smul.addr %s343, 32
        %s347 = sadd.s32 %s345, %s346
        %s348 = smul.addr %s347, 4
        %s349 = scalar_lea.vmem %s6, %s348
        %p350 = pneg %p162
        %p351 = pneg %p159
        %p352 = pneg %p188
        %p353 = pneg %p185
        %s354 = sand.u32 %s175, 1
        %s355 = scalar_lea.sflag [#allocation9], %s354
        %s356 = sand.u32 %s175, 1
        %s357 = smul.addr %s356, 8
        %s358 = scalar_lea.vmem [#allocation8], %s357
        %s359 = sld [smem:[#allocation4 + %s40]]
        %p360 = scmp.lt.s32.totalorder %s359, 3
        %s361 = scalar_select %p360, %s359, 3
        %p362 = scmp.lt.s32.totalorder %s39, 1
        %s363 = scalar_select %p362, %s39, 1
        %s364 = smul.addr %s361, 2
        %s365 = sadd.s32 %s363, %s364
        %s366 = smul.addr %s365, 8
        %s367 = scalar_lea.vmem %s3, %s366
        %s368 = sld [smem:[#allocation4 + %s40]]
        %p369 = scmp.lt.s32.totalorder %s39, 1
        %s370 = scalar_select %p369, %s39, 1
        %s371 = smul.addr %s370, 4
        %s372 = scalar_lea.vmem %s4, %s371
        %s373 = sld [smem:[#allocation4 + %s40]]
        %s374 = sld [smem:[#allocation5 + %s40]]
        %s375 = smul.u32 2, %s374
        %s376 = sld [smem:[#allocation4 + %s40]]
        %s377 = sld [smem:[#allocation5 + %s40]]
        %s378 = smul.u32 16, %s377
        %p379 = scmp.lt.s32.totalorder %s376, 3
        %s380 = scalar_select %p379, %s376, 3
        %p381 = scmp.lt.s32.totalorder %s378, 31
        %s382 = scalar_select %p381, %s378, 31
        %s383 = smul.addr %s380, 32
        %s384 = sadd.s32 %s382, %s383
        %s385 = smul.addr %s384, 4
        %s386 = scalar_lea.vmem %s6, %s385
        %s387 = sld [smem:[#allocation4 + %s40]]
        %s388 = sld [smem:[#allocation5 + %s40]]
        %s389 = smul.u32 16, %s388
        %s391 = sld [smem:[#allocation6 + %s40]]
        %p392 = scmp.gt.s32.totalorder %s391, 0
        %p393 = scmp.eq.s32.totalorder %s40, 0
        %p394 = scmp.le.s32.totalorder %s391, 0
        %p395 = pnand %p393, %p394
        %p396 = pneg %p395
        // Predicated region
        $region75: #{tpu_custom_call.1} parent=69 // pred_check
          _
        $region76: #{tpu_custom_call.1} parent=69 // pred_check_branch
          %398 = sbr.rel (%p395) target = $region78
        $region77: #{tpu_custom_call.1} parent=69 // pred_region
          %vm399 = vcmask 261120
          %400 = vst.msk [vmem:[#allocation2] sm:$0xff] %vm399, 0.0
        $region78: #{tpu_custom_call.1} parent=69 // pred_fallthru
          _
        // Predicated region
        $region79: #{tpu_custom_call.1} parent=69 // pred_check
          %p401 = pneg %p392
        $region80: #{tpu_custom_call.1} parent=69 // pred_check_branch
          %403 = sbr.rel (%p401) target = $region82
        $region81: #{tpu_custom_call.1} parent=69 // pred_region
          %v404 = vld [vmem:[%s372] sm:$0xf]
          %v405 = vld [vmem:[%s312] sm:$0xff]
          %v406 = vld [vmem:[%s312 + $0x8] sm:$0xff]
          %v407 = vld [vmem:[%s312 + $0x10] sm:$0xff]
          %v408 = vld [vmem:[%s312 + $0x18] sm:$0xff]
          %v413 = vunpack.c.l.b16 %v405
          %v414 = vunpack.c.h.b16 %v405
          %v415 = vunpack.c.l.b16 %v406
          %v416 = vunpack.c.h.b16 %v406
          %v417 = vunpack.c.l.b16 %v407
          %v418 = vunpack.c.h.b16 %v407
          %v419 = vunpack.c.l.b16 %v408
          %v420 = vunpack.c.h.b16 %v408
          %v421 = vpack.c.b16 %v415, %v413
          %v422 = vpack.c.b16 %v416, %v414
          %v423 = vpack.c.b16 %v419, %v417
          %v424 = vpack.c.b16 %v420, %v418
          %vm429 = vcmask 261120
          %v431 = vsel %vm429, %v404, 0
          %433 = vmatprep.subr.bf16.mxu0 %v422
          %434 = vmatpush1.bf16.msra.mxu0 %v421
          %435 = vmatprep.subr.bf16.mxu0 %v424
          %436 = vmatpush1.bf16.msra.mxu0 %v423
          %437 = vmatprep.subr.bf16.mxu0 0
          %438 = vmatpush1.bf16.msra.mxu0 0
          %439 = vmatprep.subr.bf16.mxu0 0
          %440 = vmatpush1.bf16.msra.mxu0 0
          %441 = vmatprep.subr.bf16.mxu0 0
          %442 = vmatpush1.bf16.msra.mxu0 0
          %443 = vmatprep.subr.bf16.mxu0 0
          %444 = vmatpush1.bf16.msra.mxu0 0
          %445 = vmatprep.subr.bf16.mxu0 0
          %446 = vmatpush1.bf16.msra.mxu0 0
          %447 = vmatprep.subr.bf16.mxu0 0
          %448 = vmatpush1.bf16.msra.mxu0 0
          %449 = vmatprep.subr.bf16.mxu0 0
          %450 = vmatpush1.bf16.msra.mxu0 0
          %451 = vmatprep.subr.bf16.mxu0 0
          %452 = vmatpush1.bf16.msra.mxu0 0
          %453 = vmatprep.subr.bf16.mxu0 0
          %454 = vmatpush1.bf16.msra.mxu0 0
          %455 = vmatprep.subr.bf16.mxu0 0
          %456 = vmatpush1.bf16.msra.mxu0 0
          %457 = vmatprep.subr.bf16.mxu0 0
          %458 = vmatpush1.bf16.msra.mxu0 0
          %459 = vmatprep.subr.bf16.mxu0 0
          %460 = vmatpush1.bf16.msra.mxu0 0
          %461 = vmatprep.subr.bf16.mxu0 0
          %462 = vmatpush1.bf16.msra.mxu0 0
          %463 = vmatprep.subr.bf16.mxu0 0
          %464 = vmatpush1.bf16.msra.mxu0 0
          %465 = vmatprep.mubr.bf16.mxu0 0
          %466 = vmatmul.mubr.bf16.gmra.mrb[0].mxu0 %v431
          %v467 = vpop.f32.mrb[0].mxu0
          %v468 = vadd.f32 0.0, %v467
          %v469 = vpop.f32.mrb[0].mxu0
          %v470 = vadd.f32 0.0, %v469
          %v471 = vpop.f32.mrb[0].mxu0
          %v472 = vpop.f32.mrb[0].mxu0
          %473 = vdwg.mxu0
          %v474 = vxor.u32 %v468, 2147483648
          %v475 = vmul.f32 %v474, 1.442695
          %v476 = vpow.pop %v475
          %v477 = vadd.f32 %v476, 1.0
          %v478 = vrcp.pop %v477
          %v479 = vmul.f32 1.0, %v478
          %v480 = vmul.f32 %v468, %v479
          %v481 = vmul.f32 %v470, %v480
          %v482 = vld [vmem:[%s367] sm:$0xff]
          %484 = vset.pattern.permute.xlu0 0
          %485 = vperm.xlu0 %484, %v482
          %v486 = vpop.permute.xlu0 %485
          %v488 = vmul.f32 %v481, %v486
          %v489 = vpack.c.bf16 %v488, %v488
          %v490 = vld [vmem:[%s386] sm:$0xf]
          %v491 = vld [vmem:[%s386 + $0x4] sm:$0xf]
          %v492 = vld [vmem:[%s386 + $0x8] sm:$0xf]
          %v493 = vld [vmem:[%s386 + $0xc] sm:$0xf]
          %v494 = vld [vmem:[%s386 + $0x10] sm:$0xf]
          %v495 = vld [vmem:[%s386 + $0x14] sm:$0xf]
          %v496 = vld [vmem:[%s386 + $0x18] sm:$0xf]
          %v497 = vld [vmem:[%s386 + $0x1c] sm:$0xf]
          %v498 = vld [vmem:[%s386 + $0x20] sm:$0xf]
          %v499 = vld [vmem:[%s386 + $0x24] sm:$0xf]
          %v500 = vld [vmem:[%s386 + $0x28] sm:$0xf]
          %v501 = vld [vmem:[%s386 + $0x2c] sm:$0xf]
          %v502 = vld [vmem:[%s386 + $0x30] sm:$0xf]
          %v503 = vld [vmem:[%s386 + $0x34] sm:$0xf]
          %v504 = vld [vmem:[%s386 + $0x38] sm:$0xf]
          %v505 = vld [vmem:[%s386 + $0x3c] sm:$0xf]
          %v522 = vunpack.c.l.b16 %v490
          %v523 = vunpack.c.l.b16 %v491
          %v524 = vunpack.c.l.b16 %v492
          %v525 = vunpack.c.l.b16 %v493
          %v526 = vunpack.c.l.b16 %v494
          %v527 = vunpack.c.l.b16 %v495
          %v528 = vunpack.c.l.b16 %v496
          %v529 = vunpack.c.l.b16 %v497
          %v530 = vunpack.c.l.b16 %v498
          %v531 = vunpack.c.l.b16 %v499
          %v532 = vunpack.c.l.b16 %v500
          %v533 = vunpack.c.l.b16 %v501
          %v534 = vunpack.c.l.b16 %v502
          %v535 = vunpack.c.l.b16 %v503
          %v536 = vunpack.c.l.b16 %v504
          %v537 = vunpack.c.l.b16 %v505
          %v538 = vpack.c.b16 %v523, %v522
          %v539 = vpack.c.b16 %v525, %v524
          %v540 = vpack.c.b16 %v527, %v526
          %v541 = vpack.c.b16 %v529, %v528
          %v542 = vpack.c.b16 %v531, %v530
          %v543 = vpack.c.b16 %v533, %v532
          %v544 = vpack.c.b16 %v535, %v534
          %v545 = vpack.c.b16 %v537, %v536
          %554 = vmatprep.subr.bf16.mxu0 0
          %555 = vmatpush1.bf16.msra.mxu0 %v538
          %556 = vmatprep.subr.bf16.mxu0 0
          %557 = vmatpush1.bf16.msra.mxu0 %v539
          %558 = vmatprep.subr.bf16.mxu0 0
          %559 = vmatpush1.bf16.msra.mxu0 %v540
          %560 = vmatprep.subr.bf16.mxu0 0
          %561 = vmatpush1.bf16.msra.mxu0 %v541
          %562 = vmatprep.subr.bf16.mxu0 0
          %563 = vmatpush1.bf16.msra.mxu0 %v542
          %564 = vmatprep.subr.bf16.mxu0 0
          %565 = vmatpush1.bf16.msra.mxu0 %v543
          %566 = vmatprep.subr.bf16.mxu0 0
          %567 = vmatpush1.bf16.msra.mxu0 %v544
          %568 = vmatprep.subr.bf16.mxu0 0
          %569 = vmatpush1.bf16.msra.mxu0 %v545
          %570 = vmatprep.subr.bf16.mxu0 0
          %571 = vmatpush1.bf16.msra.mxu0 0
          %572 = vmatprep.subr.bf16.mxu0 0
          %573 = vmatpush1.bf16.msra.mxu0 0
          %574 = vmatprep.subr.bf16.mxu0 0
          %575 = vmatpush1.bf16.msra.mxu0 0
          %576 = vmatprep.subr.bf16.mxu0 0
          %577 = vmatpush1.bf16.msra.mxu0 0
          %578 = vmatprep.subr.bf16.mxu0 0
          %579 = vmatpush1.bf16.msra.mxu0 0
          %580 = vmatprep.subr.bf16.mxu0 0
          %581 = vmatpush1.bf16.msra.mxu0 0
          %582 = vmatprep.subr.bf16.mxu0 0
          %583 = vmatpush1.bf16.msra.mxu0 0
          %584 = vmatprep.subr.bf16.mxu0 0
          %585 = vmatpush1.bf16.msra.mxu0 0
          %586 = vmatprep.mubr.bf16.mxu0 0
          %587 = vmatmul.mubr.bf16.gmra.mrb[0].mxu0 %v489
          %v588 = vpop.f32.mrb[0].mxu0
          %v589 = vadd.f32 0.0, %v588
          %v590 = vpop.f32.mrb[0].mxu0
          %v591 = vpop.f32.mrb[0].mxu0
          %v592 = vpop.f32.mrb[0].mxu0
          %593 = vdwg.mxu0
          // Predicated region
          $region83: #{tpu_custom_call.1} parent=81 // pred_check
            %p594 = pneg %p393
          $region84: #{tpu_custom_call.1} parent=81 // pred_check_branch
            %596 = sbr.rel (%p594) target = $region86
          $region85: #{tpu_custom_call.1} parent=81 // pred_region
            %597 = vst.msk [vmem:[#allocation2] sm:$0xff] %vm429, %v589
          $region86: #{tpu_custom_call.1} parent=81 // pred_fallthru
            _
          %p598 = scmp.gt.s32.totalorder %s40, 0
          // Predicated region
          $region87: #{tpu_custom_call.1} parent=81 // pred_check
            %p599 = pneg %p598
          $region88: #{tpu_custom_call.1} parent=81 // pred_check_branch
            %601 = sbr.rel (%p599) target = $region90
          $region89: #{tpu_custom_call.1} parent=81 // pred_region
            %v602 = vld [vmem:[#allocation2] sm:$0xff]
            %v603 = vadd.f32 %v602, %v589
            %604 = vst.msk [vmem:[#allocation2] sm:$0xff] %vm429, %v603
          $region90: #{tpu_custom_call.1} parent=81 // pred_fallthru
            _
        $region82: #{tpu_custom_call.1} parent=69 // pred_fallthru
          _
        %p605 = scmp.eq.s32.totalorder %s40, 7
        // Predicated region
        $region91: #{tpu_custom_call.1} parent=69 // pred_check
          %p606 = pneg %p605
        $region92: #{tpu_custom_call.1} parent=69 // pred_check_branch
          %608 = sbr.rel (%p606) target = $region94
        $region93: #{tpu_custom_call.1} parent=69 // pred_region
          %v609 = vld [vmem:[#allocation2] sm:$0xff]
          %vm610 = vcmask 261120
          %611 = vst.msk [vmem:[%s358] sm:$0xff] %vm610, %v609
        $region94: #{tpu_custom_call.1} parent=69 // pred_fallthru
          _
        %s612 = sand.u32 %s175, 1
        %s613 = scalar_lea.sflag [#allocation9], %s612
        %s614 = sand.u32 %s175, 1
        %s615 = smul.addr %s614, 8
        %s616 = scalar_lea.vmem [#allocation8], %s615
        // Predicated region
        $region95: #{tpu_custom_call.1} parent=69 // pred_check
          %p617 = pneg %p185
        $region96: #{tpu_custom_call.1} parent=69 // pred_check_branch
          %619 = sbr.rel (%p617) target = $region98
        $region97: #{tpu_custom_call.1} parent=69 // pred_region
          %s621 = ssub.s32 128, 128
          %622 = vsyncadd %s613, %s621
          %s623 = smul.addr %s39, 128
          %s624 = scalar_lea.hbm %s7, %s623
          %s626 = sshll.u32 %s616, 4
          %s627 = int_to_ptr.vmem [resolvable:$true] %s626
          %629 = dma.vmem_to_hbm [thread:$0]  %s627, 128, %s624, %s613
        $region98: #{tpu_custom_call.1} parent=69 // pred_fallthru
          _
      $region70: #{tpu_custom_call.1} parent=5 // pred_fallthru
        _
      %p630 = scmp.le.s32.totalorder 2, %s30
      // Predicated region
      $region99: #{tpu_custom_call.1} parent=5 // pred_check
        %p631 = pneg %p630
      $region100: #{tpu_custom_call.1} parent=5 // pred_check_branch
        %633 = sbr.rel (%p631) target = $region102
      $region101: #{tpu_custom_call.1} parent=5 // pred_region
        %s634 = ssub.s32 %s30, 2
        // Predicated region
        $region103: #{tpu_custom_call.1} parent=101 // pred_check
          %p635 = pneg %p191
        $region104: #{tpu_custom_call.1} parent=101 // pred_check_branch
          %637 = sbr.rel (%p635) target = $region106
        $region105: #{tpu_custom_call.1} parent=101 // pred_region
          %s638 = sand.u32 %s176, 1
          %s639 = scalar_lea.sflag [#allocation9], %s638
          %s640 = sand.u32 %s176, 1
          %s641 = smul.addr %s640, 8
          %s642 = scalar_lea.vmem [#allocation8], %s641
          %643 = dma.done %s639, 128
        $region106: #{tpu_custom_call.1} parent=101 // pred_fallthru
          _
      $region102: #{tpu_custom_call.1} parent=5 // pred_fallthru
        _
    $region6: #{tpu_custom_call.1} parent=1 // loop_footer
      %s34 = sadd.s32 1, %s30
    $region7: #{tpu_custom_call.1} parent=1 // loop_footer_branch
      %29 = sbr.rel target = $region3
    $region8: #{tpu_custom_call.1} parent=1 // loop_exit
      _
    %644 = vsyncpa [#allocation9], 1
    %s645 = scalar_lea.sflag [#allocation9], 1
    %646 = vsyncpa %s645, 1

</llo_original>
